<compile_context>
chip_gen: v7x
topology: tpu7x:2x2x1
jax: 0.10.0
libtpu: 0.0.40
codegen_flags: <defaults>
</compile_context>

<pallas_src>
import jax
import jax.numpy as jnp
from jax import lax
from jax.experimental import pallas as pl
from jax.experimental.pallas import tpu as pltpu

C_OUT = 3
K = 3


def conv_add_relu_kernel(w_ref, b_ref, taps_ref, out_ref):
    # w_ref   : SMEM f32[27]            summed weights (w1+w2), flattened (C_OUT, K, K)
    # b_ref   : SMEM f32[3]             summed biases  (b1+b2)
    # taps_ref: VMEM f32[9, N, H*W]     9 shifted copies of the padded input (im2col taps)
    # out_ref : VMEM f32[C_OUT, N, H*W] lane-dense output (transposed/reshaped in wrapper)
    n = out_ref.shape[1]
    hw = out_ref.shape[2]

    # Load the 9 taps once; reused across all output channels (hoisted).
    taps = [taps_ref[k] for k in range(K * K)]            # each (N, H*W)

    for c in range(C_OUT):
        acc = jnp.full((n, hw), b_ref[c], dtype=jnp.float32)
        for k in range(K * K):
            acc = acc + w_ref[c * K * K + k] * taps[k]    # scalar-broadcast VPU FMA
        out_ref[c] = jnp.maximum(acc, 0.0)                # unmasked 256-lane store


def conv_add_relu(x, w1, b1, w2, b2):
    """x: (N, 1, H, W) f32; w*: (3, 1, 3, 3) f32; b*: (3,) f32 -> (N, 3, H, W) f32."""
    N, c_in, H, W = x.shape
    assert c_in == 1
    HW = H * W

    # Layout plumbing (XLA side, tiny): zero-pad and build the nine shifted,
    # lane-dense (N, H*W) taps so the kernel body is pure aligned VPU work.
    xpad = jnp.pad(x[:, 0].astype(jnp.float32), ((0, 0), (1, 1), (1, 1)))  # (N, H+2, W+2)
    taps = jnp.stack(
        [xpad[:, dy:dy + H, dx:dx + W].reshape(N, HW)
         for dy in range(K) for dx in range(K)],
        axis=0,
    )                                                       # (9, N, H*W)

    # Both convs read the same input: fold them into one conv with summed params.
    w_sum = (w1 + w2).reshape(C_OUT * K * K).astype(jnp.float32)   # (27,)
    b_sum = (b1 + b2).astype(jnp.float32)                          # (3,)

    smem = pltpu.MemorySpace.SMEM
    vmem = pltpu.MemorySpace.VMEM

    out = pl.pallas_call(
        conv_add_relu_kernel,
        out_shape=jax.ShapeDtypeStruct((C_OUT, N, HW), jnp.float32),
        in_specs=[
            pl.BlockSpec(memory_space=smem),   # w_sum
            pl.BlockSpec(memory_space=smem),   # b_sum
            pl.BlockSpec(memory_space=vmem),   # taps
        ],
        out_specs=pl.BlockSpec(memory_space=vmem),
    )(w_sum, b_sum, taps)

    # (C_OUT, N, H*W) -> (N, C_OUT, H, W): wrapper-side layout plumbing.
    return out.transpose(1, 0, 2).reshape(N, C_OUT, H, W)


def _reference(x, w1, b1, w2, b2):
    dn = ("NCHW", "OIHW", "NCHW")
    v1 = lax.conv_general_dilated(x, w1, (1, 1), ((1, 1), (1, 1)),
                                  dimension_numbers=dn) + b1[None, :, None, None]
    v2 = lax.conv_general_dilated(x, w2, (1, 1), ((1, 1), (1, 1)),
                                  dimension_numbers=dn) + b2[None, :, None, None]
    return jnp.maximum(v1 + v2, 0.0)


if __name__ == "__main__":
    key = jax.random.PRNGKey(0)
    kx, k1, k2, k3, k4 = jax.random.split(key, 5)

    N, H, W = 2, 16, 16
    x = jax.random.normal(kx, (N, 1, H, W), dtype=jnp.float32)

    # Deterministic parameter init (shapes from the module's __init__).
    w1 = 0.1 * jax.random.normal(k1, (C_OUT, 1, K, K), dtype=jnp.float32)
    b1 = 0.1 * jax.random.normal(k2, (C_OUT,), dtype=jnp.float32)
    w2 = 0.1 * jax.random.normal(k3, (C_OUT, 1, K, K), dtype=jnp.float32)
    b2 = 0.1 * jax.random.normal(k4, (C_OUT,), dtype=jnp.float32)

    out = conv_add_relu(x, w1, b1, w2, b2)
    out = jax.block_until_ready(out)

    ref = _reference(x, w1, b1, w2, b2)
    assert out.shape == (N, C_OUT, H, W)
    assert jnp.allclose(out, ref, atol=1e-5, rtol=1e-5)

    print("KERNEL_OK")
</pallas_src>

<mosaic_0001>
module attributes {stable_mosaic.version = 11 : i64} {
  func.func @conv_add_relu_kernel(%arg0: memref<27xf32, #tpu.memory_space<smem>>, %arg1: memref<3xf32, #tpu.memory_space<smem>>, %arg2: memref<9x2x256xf32, #tpu.memory_space<vmem>>, %arg3: memref<3x2x256xf32, #tpu.memory_space<vmem>>) attributes {dimension_semantics = [], scalar_prefetch = 0 : i64, scratch_operands = 0 : i64, tpu.core_type = #tpu.core_type<tc>} {
    %c0 = arith.constant 0 : index
    %c0_0 = arith.constant 0 : index
    %c0_1 = arith.constant 0 : index
    %0 = vector.load %arg2[%c0, %c0_0, %c0_1] : memref<9x2x256xf32, #tpu.memory_space<vmem>>, vector<1x2x256xf32>
    %1 = vector.shape_cast %0 : vector<1x2x256xf32> to vector<2x256xf32>
    %c1 = arith.constant 1 : index
    %c0_2 = arith.constant 0 : index
    %c0_3 = arith.constant 0 : index
    %2 = vector.load %arg2[%c1, %c0_2, %c0_3] : memref<9x2x256xf32, #tpu.memory_space<vmem>>, vector<1x2x256xf32>
    %3 = vector.shape_cast %2 : vector<1x2x256xf32> to vector<2x256xf32>
    %c2 = arith.constant 2 : index
    %c0_4 = arith.constant 0 : index
    %c0_5 = arith.constant 0 : index
    %4 = vector.load %arg2[%c2, %c0_4, %c0_5] : memref<9x2x256xf32, #tpu.memory_space<vmem>>, vector<1x2x256xf32>
    %5 = vector.shape_cast %4 : vector<1x2x256xf32> to vector<2x256xf32>
    %c3 = arith.constant 3 : index
    %c0_6 = arith.constant 0 : index
    %c0_7 = arith.constant 0 : index
    %6 = vector.load %arg2[%c3, %c0_6, %c0_7] : memref<9x2x256xf32, #tpu.memory_space<vmem>>, vector<1x2x256xf32>
    %7 = vector.shape_cast %6 : vector<1x2x256xf32> to vector<2x256xf32>
    %c4 = arith.constant 4 : index
    %c0_8 = arith.constant 0 : index
    %c0_9 = arith.constant 0 : index
    %8 = vector.load %arg2[%c4, %c0_8, %c0_9] : memref<9x2x256xf32, #tpu.memory_space<vmem>>, vector<1x2x256xf32>
    %9 = vector.shape_cast %8 : vector<1x2x256xf32> to vector<2x256xf32>
    %c5 = arith.constant 5 : index
    %c0_10 = arith.constant 0 : index
    %c0_11 = arith.constant 0 : index
    %10 = vector.load %arg2[%c5, %c0_10, %c0_11] : memref<9x2x256xf32, #tpu.memory_space<vmem>>, vector<1x2x256xf32>
    %11 = vector.shape_cast %10 : vector<1x2x256xf32> to vector<2x256xf32>
    %c6 = arith.constant 6 : index
    %c0_12 = arith.constant 0 : index
    %c0_13 = arith.constant 0 : index
    %12 = vector.load %arg2[%c6, %c0_12, %c0_13] : memref<9x2x256xf32, #tpu.memory_space<vmem>>, vector<1x2x256xf32>
    %13 = vector.shape_cast %12 : vector<1x2x256xf32> to vector<2x256xf32>
    %c7 = arith.constant 7 : index
    %c0_14 = arith.constant 0 : index
    %c0_15 = arith.constant 0 : index
    %14 = vector.load %arg2[%c7, %c0_14, %c0_15] : memref<9x2x256xf32, #tpu.memory_space<vmem>>, vector<1x2x256xf32>
    %15 = vector.shape_cast %14 : vector<1x2x256xf32> to vector<2x256xf32>
    %c8 = arith.constant 8 : index
    %c0_16 = arith.constant 0 : index
    %c0_17 = arith.constant 0 : index
    %16 = vector.load %arg2[%c8, %c0_16, %c0_17] : memref<9x2x256xf32, #tpu.memory_space<vmem>>, vector<1x2x256xf32>
    %17 = vector.shape_cast %16 : vector<1x2x256xf32> to vector<2x256xf32>
    %c0_18 = arith.constant 0 : index
    %18 = memref.load %arg1[%c0_18] : memref<3xf32, #tpu.memory_space<smem>>
    %19 = vector.broadcast %18 : f32 to vector<2x256xf32>
    %c0_19 = arith.constant 0 : index
    %20 = memref.load %arg0[%c0_19] : memref<27xf32, #tpu.memory_space<smem>>
    %21 = vector.broadcast %20 : f32 to vector<2x256xf32>
    %22 = arith.mulf %21, %1 : vector<2x256xf32>
    %23 = arith.addf %19, %22 : vector<2x256xf32>
    %c1_20 = arith.constant 1 : index
    %24 = memref.load %arg0[%c1_20] : memref<27xf32, #tpu.memory_space<smem>>
    %25 = vector.broadcast %24 : f32 to vector<2x256xf32>
    %26 = arith.mulf %25, %3 : vector<2x256xf32>
    %27 = arith.addf %23, %26 : vector<2x256xf32>
    %c2_21 = arith.constant 2 : index
    %28 = memref.load %arg0[%c2_21] : memref<27xf32, #tpu.memory_space<smem>>
    %29 = vector.broadcast %28 : f32 to vector<2x256xf32>
    %30 = arith.mulf %29, %5 : vector<2x256xf32>
    %31 = arith.addf %27, %30 : vector<2x256xf32>
    %c3_22 = arith.constant 3 : index
    %32 = memref.load %arg0[%c3_22] : memref<27xf32, #tpu.memory_space<smem>>
    %33 = vector.broadcast %32 : f32 to vector<2x256xf32>
    %34 = arith.mulf %33, %7 : vector<2x256xf32>
    %35 = arith.addf %31, %34 : vector<2x256xf32>
    %c4_23 = arith.constant 4 : index
    %36 = memref.load %arg0[%c4_23] : memref<27xf32, #tpu.memory_space<smem>>
    %37 = vector.broadcast %36 : f32 to vector<2x256xf32>
    %38 = arith.mulf %37, %9 : vector<2x256xf32>
    %39 = arith.addf %35, %38 : vector<2x256xf32>
    %c5_24 = arith.constant 5 : index
    %40 = memref.load %arg0[%c5_24] : memref<27xf32, #tpu.memory_space<smem>>
    %41 = vector.broadcast %40 : f32 to vector<2x256xf32>
    %42 = arith.mulf %41, %11 : vector<2x256xf32>
    %43 = arith.addf %39, %42 : vector<2x256xf32>
    %c6_25 = arith.constant 6 : index
    %44 = memref.load %arg0[%c6_25] : memref<27xf32, #tpu.memory_space<smem>>
    %45 = vector.broadcast %44 : f32 to vector<2x256xf32>
    %46 = arith.mulf %45, %13 : vector<2x256xf32>
    %47 = arith.addf %43, %46 : vector<2x256xf32>
    %c7_26 = arith.constant 7 : index
    %48 = memref.load %arg0[%c7_26] : memref<27xf32, #tpu.memory_space<smem>>
    %49 = vector.broadcast %48 : f32 to vector<2x256xf32>
    %50 = arith.mulf %49, %15 : vector<2x256xf32>
    %51 = arith.addf %47, %50 : vector<2x256xf32>
    %c8_27 = arith.constant 8 : index
    %52 = memref.load %arg0[%c8_27] : memref<27xf32, #tpu.memory_space<smem>>
    %53 = vector.broadcast %52 : f32 to vector<2x256xf32>
    %54 = arith.mulf %53, %17 : vector<2x256xf32>
    %55 = arith.addf %51, %54 : vector<2x256xf32>
    %cst = arith.constant 0.000000e+00 : f32
    %56 = vector.broadcast %cst : f32 to vector<2x256xf32>
    %57 = arith.maximumf %55, %56 : vector<2x256xf32>
    %c0_28 = arith.constant 0 : index
    %c0_29 = arith.constant 0 : index
    %c0_30 = arith.constant 0 : index
    %58 = vector.load %arg3[%c0_28, %c0_29, %c0_30] : memref<3x2x256xf32, #tpu.memory_space<vmem>>, vector<1x2x256xf32>
    %59 = vector.shape_cast %58 : vector<1x2x256xf32> to vector<2x256xf32>
    %60 = vector.shape_cast %57 : vector<2x256xf32> to vector<1x2x256xf32>
    tpu.vector_store %arg3[%c0_28, %c0_29, %c0_30], %60 {strides = array<i32>} : memref<3x2x256xf32, #tpu.memory_space<vmem>>, vector<1x2x256xf32>,
    %c1_31 = arith.constant 1 : index
    %61 = memref.load %arg1[%c1_31] : memref<3xf32, #tpu.memory_space<smem>>
    %62 = vector.broadcast %61 : f32 to vector<2x256xf32>
    %c9 = arith.constant 9 : index
    %63 = memref.load %arg0[%c9] : memref<27xf32, #tpu.memory_space<smem>>
    %64 = vector.broadcast %63 : f32 to vector<2x256xf32>
    %65 = arith.mulf %64, %1 : vector<2x256xf32>
    %66 = arith.addf %62, %65 : vector<2x256xf32>
    %c10 = arith.constant 10 : index
    %67 = memref.load %arg0[%c10] : memref<27xf32, #tpu.memory_space<smem>>
    %68 = vector.broadcast %67 : f32 to vector<2x256xf32>
    %69 = arith.mulf %68, %3 : vector<2x256xf32>
    %70 = arith.addf %66, %69 : vector<2x256xf32>
    %c11 = arith.constant 11 : index
    %71 = memref.load %arg0[%c11] : memref<27xf32, #tpu.memory_space<smem>>
    %72 = vector.broadcast %71 : f32 to vector<2x256xf32>
    %73 = arith.mulf %72, %5 : vector<2x256xf32>
    %74 = arith.addf %70, %73 : vector<2x256xf32>
    %c12 = arith.constant 12 : index
    %75 = memref.load %arg0[%c12] : memref<27xf32, #tpu.memory_space<smem>>
    %76 = vector.broadcast %75 : f32 to vector<2x256xf32>
    %77 = arith.mulf %76, %7 : vector<2x256xf32>
    %78 = arith.addf %74, %77 : vector<2x256xf32>
    %c13 = arith.constant 13 : index
    %79 = memref.load %arg0[%c13] : memref<27xf32, #tpu.memory_space<smem>>
    %80 = vector.broadcast %79 : f32 to vector<2x256xf32>
    %81 = arith.mulf %80, %9 : vector<2x256xf32>
    %82 = arith.addf %78, %81 : vector<2x256xf32>
    %c14 = arith.constant 14 : index
    %83 = memref.load %arg0[%c14] : memref<27xf32, #tpu.memory_space<smem>>
    %84 = vector.broadcast %83 : f32 to vector<2x256xf32>
    %85 = arith.mulf %84, %11 : vector<2x256xf32>
    %86 = arith.addf %82, %85 : vector<2x256xf32>
    %c15 = arith.constant 15 : index
    %87 = memref.load %arg0[%c15] : memref<27xf32, #tpu.memory_space<smem>>
    %88 = vector.broadcast %87 : f32 to vector<2x256xf32>
    %89 = arith.mulf %88, %13 : vector<2x256xf32>
    %90 = arith.addf %86, %89 : vector<2x256xf32>
    %c16 = arith.constant 16 : index
    %91 = memref.load %arg0[%c16] : memref<27xf32, #tpu.memory_space<smem>>
    %92 = vector.broadcast %91 : f32 to vector<2x256xf32>
    %93 = arith.mulf %92, %15 : vector<2x256xf32>
    %94 = arith.addf %90, %93 : vector<2x256xf32>
    %c17 = arith.constant 17 : index
    %95 = memref.load %arg0[%c17] : memref<27xf32, #tpu.memory_space<smem>>
    %96 = vector.broadcast %95 : f32 to vector<2x256xf32>
    %97 = arith.mulf %96, %17 : vector<2x256xf32>
    %98 = arith.addf %94, %97 : vector<2x256xf32>
    %cst_32 = arith.constant 0.000000e+00 : f32
    %99 = vector.broadcast %cst_32 : f32 to vector<2x256xf32>
    %100 = arith.maximumf %98, %99 : vector<2x256xf32>
    %c1_33 = arith.constant 1 : index
    %c0_34 = arith.constant 0 : index
    %c0_35 = arith.constant 0 : index
    %101 = vector.load %arg3[%c1_33, %c0_34, %c0_35] : memref<3x2x256xf32, #tpu.memory_space<vmem>>, vector<1x2x256xf32>
    %102 = vector.shape_cast %101 : vector<1x2x256xf32> to vector<2x256xf32>
    %103 = vector.shape_cast %100 : vector<2x256xf32> to vector<1x2x256xf32>
    tpu.vector_store %arg3[%c1_33, %c0_34, %c0_35], %103 {strides = array<i32>} : memref<3x2x256xf32, #tpu.memory_space<vmem>>, vector<1x2x256xf32>,
    %c2_36 = arith.constant 2 : index
    %104 = memref.load %arg1[%c2_36] : memref<3xf32, #tpu.memory_space<smem>>
    %105 = vector.broadcast %104 : f32 to vector<2x256xf32>
    %c18 = arith.constant 18 : index
    %106 = memref.load %arg0[%c18] : memref<27xf32, #tpu.memory_space<smem>>
    %107 = vector.broadcast %106 : f32 to vector<2x256xf32>
    %108 = arith.mulf %107, %1 : vector<2x256xf32>
    %109 = arith.addf %105, %108 : vector<2x256xf32>
    %c19 = arith.constant 19 : index
    %110 = memref.load %arg0[%c19] : memref<27xf32, #tpu.memory_space<smem>>
    %111 = vector.broadcast %110 : f32 to vector<2x256xf32>
    %112 = arith.mulf %111, %3 : vector<2x256xf32>
    %113 = arith.addf %109, %112 : vector<2x256xf32>
    %c20 = arith.constant 20 : index
    %114 = memref.load %arg0[%c20] : memref<27xf32, #tpu.memory_space<smem>>
    %115 = vector.broadcast %114 : f32 to vector<2x256xf32>
    %116 = arith.mulf %115, %5 : vector<2x256xf32>
    %117 = arith.addf %113, %116 : vector<2x256xf32>
    %c21 = arith.constant 21 : index
    %118 = memref.load %arg0[%c21] : memref<27xf32, #tpu.memory_space<smem>>
    %119 = vector.broadcast %118 : f32 to vector<2x256xf32>
    %120 = arith.mulf %119, %7 : vector<2x256xf32>
    %121 = arith.addf %117, %120 : vector<2x256xf32>
    %c22 = arith.constant 22 : index
    %122 = memref.load %arg0[%c22] : memref<27xf32, #tpu.memory_space<smem>>
    %123 = vector.broadcast %122 : f32 to vector<2x256xf32>
    %124 = arith.mulf %123, %9 : vector<2x256xf32>
    %125 = arith.addf %121, %124 : vector<2x256xf32>
    %c23 = arith.constant 23 : index
    %126 = memref.load %arg0[%c23] : memref<27xf32, #tpu.memory_space<smem>>
    %127 = vector.broadcast %126 : f32 to vector<2x256xf32>
    %128 = arith.mulf %127, %11 : vector<2x256xf32>
    %129 = arith.addf %125, %128 : vector<2x256xf32>
    %c24 = arith.constant 24 : index
    %130 = memref.load %arg0[%c24] : memref<27xf32, #tpu.memory_space<smem>>
    %131 = vector.broadcast %130 : f32 to vector<2x256xf32>
    %132 = arith.mulf %131, %13 : vector<2x256xf32>
    %133 = arith.addf %129, %132 : vector<2x256xf32>
    %c25 = arith.constant 25 : index
    %134 = memref.load %arg0[%c25] : memref<27xf32, #tpu.memory_space<smem>>
    %135 = vector.broadcast %134 : f32 to vector<2x256xf32>
    %136 = arith.mulf %135, %15 : vector<2x256xf32>
    %137 = arith.addf %133, %136 : vector<2x256xf32>
    %c26 = arith.constant 26 : index
    %138 = memref.load %arg0[%c26] : memref<27xf32, #tpu.memory_space<smem>>
    %139 = vector.broadcast %138 : f32 to vector<2x256xf32>
    %140 = arith.mulf %139, %17 : vector<2x256xf32>
    %141 = arith.addf %137, %140 : vector<2x256xf32>
    %cst_37 = arith.constant 0.000000e+00 : f32
    %142 = vector.broadcast %cst_37 : f32 to vector<2x256xf32>
    %143 = arith.maximumf %141, %142 : vector<2x256xf32>
    %c2_38 = arith.constant 2 : index
    %c0_39 = arith.constant 0 : index
    %c0_40 = arith.constant 0 : index
    %144 = vector.load %arg3[%c2_38, %c0_39, %c0_40] : memref<3x2x256xf32, #tpu.memory_space<vmem>>, vector<1x2x256xf32>
    %145 = vector.shape_cast %144 : vector<1x2x256xf32> to vector<2x256xf32>
    %146 = vector.shape_cast %143 : vector<2x256xf32> to vector<1x2x256xf32>
    tpu.vector_store %arg3[%c2_38, %c0_39, %c0_40], %146 {strides = array<i32>} : memref<3x2x256xf32, #tpu.memory_space<vmem>>, vector<1x2x256xf32>,
    return
  }
}

</mosaic_0001>

<llo_original>
// kernel: tpu_custom_call.1
$region0: #{tpu_custom_call.1}
  #allocation0 [shape = 'u32[]', space=smem, size = 0x4, offset = 0x4, fixed_abs, tag = 'smem constant byte address 0x4 - core index']
  #allocation1 [shape = 'u32[144,128]{1,0:T(1,128)}', space=vmem, size = 0x12000, scoped, tag = 'internal scratch']
  %s0 = inlined_call_operand.hbm [shape: f32[27], index: 0, kind: input, shape index: {}]
  %s1 = inlined_call_operand.vmem [shape: f32[3], index: 1, kind: input, shape index: {}]
  %s2 = inlined_call_operand.hbm [shape: f32[9,2,256], index: 2, kind: input, shape index: {}]
  %s3 = inlined_call_operand.hbm [shape: f32[3,2,256], index: 3, kind: output, shape index: {}]
  %s4 = sld [smem:[#allocation0]]
  $region34: #{tpu_custom_call.1} parent=0
    _
  %s6 = ssub.s32 1, %s4
  %s7 = scalar_select 0, %s6, %s4
  $region1: #{tpu_custom_call.1} parent=0
    #allocation2 [shape = 'u8[512]{0}', space=smem, size = 0x200, scoped, tag = 'input window, operand 0, single buffered']
    #allocation3 [shape = 's32[1]{0}', space=sflag, size = 0x4, scoped, tag = 'scoped memory for tpu_custom_call.1']
    #allocation4 [shape = 's32[1]{0}', space=sflag, size = 0x4, scoped, tag = 'scoped memory for tpu_custom_call.1']
    #allocation5 [shape = 's32[1]{0}', space=sflag, size = 0x4, scoped, tag = 'scoped memory for tpu_custom_call.1']
    #allocation6 [shape = 's32[1]{0}', space=sflag, size = 0x4, scoped, tag = 'scoped memory for tpu_custom_call.1']
    #allocation7 [shape = 'u8[512]{0}', space=smem, size = 0x200, scoped, tag = 'input window, operand 1, single buffered']
    #allocation8 [shape = 'u8[18432]{0}', space=vmem, size = 0x4800, scoped, tag = 'input window, operand 2, single buffered']
    #allocation9 [shape = 'u8[6144]{0}', space=vmem, size = 0x1800, scoped, tag = 'output window, operand 0, single buffered']
    %8 = vsyncpa [#allocation5], 0
    %9 = vsyncpa [#allocation6], 0
    %10 = vsyncpa [#allocation3], 0
    %11 = vsyncpa [#allocation4], 0
    // Predicated region
    $region2: #{tpu_custom_call.1} parent=1 // pred_check
      _
    $region3: #{tpu_custom_call.1} parent=1 // pred_check_branch
      %13 = sbr.rel (0) target = $region5
    $region4: #{tpu_custom_call.1} parent=1 // pred_region
      %s15 = ssub.s32 16, 16
      %16 = vsyncadd [#allocation5], %s15
      %19 = dma.hbm_to_smem %s0, 16, [#allocation2], [#allocation5]
    $region5: #{tpu_custom_call.1} parent=1 // pred_fallthru
      _
    // Predicated region
    $region6: #{tpu_custom_call.1} parent=1 // pred_check
      _
    $region7: #{tpu_custom_call.1} parent=1 // pred_check_branch
      %21 = sbr.rel (0) target = $region9
    $region8: #{tpu_custom_call.1} parent=1 // pred_region
      %s23 = ssub.s32 16, 16
      %24 = vsyncadd [#allocation6], %s23
      %s26 = sshll.u32 %s1, 4
      %s27 = int_to_ptr.vmem [resolvable:$true] %s26
      %29 = dma.vmem_to_smem %s27, 16, [#allocation7], [#allocation6]
    $region9: #{tpu_custom_call.1} parent=1 // pred_fallthru
      _
    // Predicated region
    $region10: #{tpu_custom_call.1} parent=1 // pred_check
      _
    $region11: #{tpu_custom_call.1} parent=1 // pred_check_branch
      %31 = sbr.rel (0) target = $region13
    $region12: #{tpu_custom_call.1} parent=1 // pred_region
      %s33 = ssub.s32 576, 576
      %34 = vsyncadd [#allocation3], %s33
      %s35 = sshll.u32 [#allocation8], 4
      %s36 = int_to_ptr.vmem [resolvable:$true] %s35
      %41 = dma.hbm_to_vmem [thread:$0]  %s2, 576, %s36, [#allocation3], 64, 64, 4
    $region13: #{tpu_custom_call.1} parent=1 // pred_fallthru
      _
    // Predicated region
    $region14: #{tpu_custom_call.1} parent=1 // pred_check
      _
    $region15: #{tpu_custom_call.1} parent=1 // pred_check_branch
      %43 = sbr.rel (0) target = $region17
    $region16: #{tpu_custom_call.1} parent=1 // pred_region
      %44 = dma.done [#allocation5], 16
    $region17: #{tpu_custom_call.1} parent=1 // pred_fallthru
      _
    // Predicated region
    $region18: #{tpu_custom_call.1} parent=1 // pred_check
      _
    $region19: #{tpu_custom_call.1} parent=1 // pred_check_branch
      %46 = sbr.rel (0) target = $region21
    $region20: #{tpu_custom_call.1} parent=1 // pred_region
      %47 = dma.done [#allocation6], 16
    $region21: #{tpu_custom_call.1} parent=1 // pred_fallthru
      _
    // Predicated region
    $region22: #{tpu_custom_call.1} parent=1 // pred_check
      _
    $region23: #{tpu_custom_call.1} parent=1 // pred_check_branch
      %49 = sbr.rel (0) target = $region25
    $region24: #{tpu_custom_call.1} parent=1 // pred_region
      %50 = dma.done [#allocation3], 576
    $region25: #{tpu_custom_call.1} parent=1 // pred_fallthru
      _
    %51 = sfence
    %v52 = vld [vmem:[#allocation8] sm:$0xf]
    %s53 = scalar_lea.vmem [#allocation8], 4
    %v54 = vld [vmem:[%s53] sm:$0xf]
    %s55 = scalar_lea.vmem [#allocation8], 8
    %v56 = vld [vmem:[%s55] sm:$0xf]
    %s57 = scalar_lea.vmem [#allocation8], 12
    %v58 = vld [vmem:[%s57] sm:$0xf]
    %s59 = scalar_lea.vmem [#allocation8], 16
    %v60 = vld [vmem:[%s59] sm:$0xf]
    %s61 = scalar_lea.vmem [#allocation8], 20
    %v62 = vld [vmem:[%s61] sm:$0xf]
    %s63 = scalar_lea.vmem [#allocation8], 24
    %v64 = vld [vmem:[%s63] sm:$0xf]
    %s65 = scalar_lea.vmem [#allocation8], 28
    %v66 = vld [vmem:[%s65] sm:$0xf]
    %s67 = scalar_lea.vmem [#allocation8], 32
    %v68 = vld [vmem:[%s67] sm:$0xf]
    %s69 = sld [smem:[#allocation7]]
    %v70 = vstv %s69
    %s71 = sld [smem:[#allocation2]]
    %v72 = vstv %s71
    %v73 = vmul.f32 %v72, %v52
    %v74 = vadd.f32 %v70, %v73
    %s75 = sld [smem:[#allocation2 + $0x1]]
    %v76 = vstv %s75
    %v77 = vmul.f32 %v76, %v54
    %v78 = vadd.f32 %v74, %v77
    %s79 = sld [smem:[#allocation2 + $0x2]]
    %v80 = vstv %s79
    %v81 = vmul.f32 %v80, %v56
    %v82 = vadd.f32 %v78, %v81
    %s83 = sld [smem:[#allocation2 + $0x3]]
    %v84 = vstv %s83
    %v85 = vmul.f32 %v84, %v58
    %v86 = vadd.f32 %v82, %v85
    %s87 = sld [smem:[#allocation2 + $0x4]]
    %v88 = vstv %s87
    %v89 = vmul.f32 %v88, %v60
    %v90 = vadd.f32 %v86, %v89
    %s91 = sld [smem:[#allocation2 + $0x5]]
    %v92 = vstv %s91
    %v93 = vmul.f32 %v92, %v62
    %v94 = vadd.f32 %v90, %v93
    %s95 = sld [smem:[#allocation2 + $0x6]]
    %v96 = vstv %s95
    %v97 = vmul.f32 %v96, %v64
    %v98 = vadd.f32 %v94, %v97
    %s99 = sld [smem:[#allocation2 + $0x7]]
    %v100 = vstv %s99
    %v101 = vmul.f32 %v100, %v66
    %v102 = vadd.f32 %v98, %v101
    %s103 = sld [smem:[#allocation2 + $0x8]]
    %v104 = vstv %s103
    %v105 = vmul.f32 %v104, %v68
    %v106 = vadd.f32 %v102, %v105
    %v107 = vmax.f32 %v106, 0.0
    %108 = vst [vmem:[#allocation9] sm:$0xf] %v107
    %s109 = sld [smem:[#allocation7 + $0x1]]
    %v110 = vstv %s109
    %s111 = sld [smem:[#allocation2 + $0x9]]
    %v112 = vstv %s111
    %v113 = vmul.f32 %v112, %v52
    %v114 = vadd.f32 %v110, %v113
    %s115 = sld [smem:[#allocation2 + $0xa]]
    %v116 = vstv %s115
    %v117 = vmul.f32 %v116, %v54
    %v118 = vadd.f32 %v114, %v117
    %s119 = sld [smem:[#allocation2 + $0xb]]
    %v120 = vstv %s119
    %v121 = vmul.f32 %v120, %v56
    %v122 = vadd.f32 %v118, %v121
    %s123 = sld [smem:[#allocation2 + $0xc]]
    %v124 = vstv %s123
    %v125 = vmul.f32 %v124, %v58
    %v126 = vadd.f32 %v122, %v125
    %s127 = sld [smem:[#allocation2 + $0xd]]
    %v128 = vstv %s127
    %v129 = vmul.f32 %v128, %v60
    %v130 = vadd.f32 %v126, %v129
    %s131 = sld [smem:[#allocation2 + $0xe]]
    %v132 = vstv %s131
    %v133 = vmul.f32 %v132, %v62
    %v134 = vadd.f32 %v130, %v133
    %s135 = sld [smem:[#allocation2 + $0xf]]
    %v136 = vstv %s135
    %v137 = vmul.f32 %v136, %v64
    %v138 = vadd.f32 %v134, %v137
    %s139 = sld [smem:[#allocation2 + $0x10]]
    %v140 = vstv %s139
    %v141 = vmul.f32 %v140, %v66
    %v142 = vadd.f32 %v138, %v141
    %s143 = sld [smem:[#allocation2 + $0x11]]
    %v144 = vstv %s143
    %v145 = vmul.f32 %v144, %v68
    %v146 = vadd.f32 %v142, %v145
    %v147 = vmax.f32 %v146, 0.0
    %s148 = scalar_lea.vmem [#allocation9], 4
    %149 = vst [vmem:[%s148] sm:$0xf] %v147
    %s150 = sld [smem:[#allocation7 + $0x2]]
    %v151 = vstv %s150
    %s152 = sld [smem:[#allocation2 + $0x12]]
    %v153 = vstv %s152
    %v154 = vmul.f32 %v153, %v52
    %v155 = vadd.f32 %v151, %v154
    %s156 = sld [smem:[#allocation2 + $0x13]]
    %v157 = vstv %s156
    %v158 = vmul.f32 %v157, %v54
    %v159 = vadd.f32 %v155, %v158
    %s160 = sld [smem:[#allocation2 + $0x14]]
    %v161 = vstv %s160
    %v162 = vmul.f32 %v161, %v56
    %v163 = vadd.f32 %v159, %v162
    %s164 = sld [smem:[#allocation2 + $0x15]]
    %v165 = vstv %s164
    %v166 = vmul.f32 %v165, %v58
    %v167 = vadd.f32 %v163, %v166
    %s168 = sld [smem:[#allocation2 + $0x16]]
    %v169 = vstv %s168
    %v170 = vmul.f32 %v169, %v60
    %v171 = vadd.f32 %v167, %v170
    %s172 = sld [smem:[#allocation2 + $0x17]]
    %v173 = vstv %s172
    %v174 = vmul.f32 %v173, %v62
    %v175 = vadd.f32 %v171, %v174
    %s176 = sld [smem:[#allocation2 + $0x18]]
    %v177 = vstv %s176
    %v178 = vmul.f32 %v177, %v64
    %v179 = vadd.f32 %v175, %v178
    %s180 = sld [smem:[#allocation2 + $0x19]]
    %v181 = vstv %s180
    %v182 = vmul.f32 %v181, %v66
    %v183 = vadd.f32 %v179, %v182
    %s184 = sld [smem:[#allocation2 + $0x1a]]
    %v185 = vstv %s184
    %v186 = vmul.f32 %v185, %v68
    %v187 = vadd.f32 %v183, %v186
    %v188 = vmax.f32 %v187, 0.0
    %s189 = scalar_lea.vmem [#allocation9], 8
    %190 = vst [vmem:[%s189] sm:$0xf] %v188
    // Predicated region
    $region26: #{tpu_custom_call.1} parent=1 // pred_check
      _
    $region27: #{tpu_custom_call.1} parent=1 // pred_check_branch
      %192 = sbr.rel (0) target = $region29
    $region28: #{tpu_custom_call.1} parent=1 // pred_region
      %s194 = ssub.s32 192, 192
      %195 = vsyncadd [#allocation4], %s194
      %s196 = sshll.u32 [#allocation9], 4
      %s197 = int_to_ptr.vmem [resolvable:$true] %s196
      %202 = dma.vmem_to_hbm [thread:$0]  %s197, 192, %s3, [#allocation4], 64, 64, 4
    $region29: #{tpu_custom_call.1} parent=1 // pred_fallthru
      _
    // Predicated region
    $region30: #{tpu_custom_call.1} parent=1 // pred_check
      _
    $region31: #{tpu_custom_call.1} parent=1 // pred_check_branch
      %204 = sbr.rel (0) target = $region33
    $region32: #{tpu_custom_call.1} parent=1 // pred_region
      %205 = dma.done [#allocation4], 192
    $region33: #{tpu_custom_call.1} parent=1 // pred_fallthru
      _
    %206 = vsyncpa [#allocation3], 1
    %207 = vsyncpa [#allocation4], 1
    %208 = vsyncpa [#allocation5], 1
    %209 = vsyncpa [#allocation6], 1

</llo_original>
